<compile_context>
chip_gen: v6e
topology: v6e:2x2x1
jax: 0.10.0
libtpu: 0.0.40
codegen_flags: <defaults>
</compile_context>

<pallas_src>
import jax
import jax.numpy as jnp
from jax.experimental import pallas as pl
from jax.experimental.pallas import tpu as pltpu

D = 100          # embedding dim hard-coded by the module (W is (100, 100, 100))
DP = 128         # D padded to the TPU lane width
BN_EPS = 1e-5


def _round_up(x, m):
    return ((x + m - 1) // m) * m


def _wmat_kernel(rel_ref, w_ref, out_ref):
    # out[r, c] = sum_k rel[r, k] * W_flat[k, c]    (one output-column chunk per step)
    out_ref[...] = jnp.dot(rel_ref[...], w_ref[...],
                           preferred_element_type=jnp.float32)


def _score_kernel(h_ref, t_ref, wr_ref, bn_ref, out_ref):
    R = wr_ref.shape[0]
    tn = out_ref.shape[0]

    # BatchNorm1d (eval), pre-folded to y = x * scale + shift (pad lanes: 0*x + 0).
    h_bn = h_ref[...] * bn_ref[0:1, :] + bn_ref[1:2, :]
    t_bn = t_ref[...] * bn_ref[2:3, :] + bn_ref[3:4, :]
    # Dropout layers (p=0.5) are identity in eval mode.

    h_mx = h_bn.astype(wr_ref.dtype)          # bf16 MXU operands, f32 accumulation
    lane = jax.lax.broadcasted_iota(jnp.int32, (1, R), 1)
    s = jnp.zeros((tn, R), jnp.float32)
    for r in range(R):                        # R is small & static -> unrolled
        # v[n, j] = sum_i h_bn[n, i] * W_r[r, i, j]                       (MXU)
        v = jnp.dot(h_mx, wr_ref[r], preferred_element_type=jnp.float32)
        # col[n] = sum_j v[n, j] * t_bn[n, j] == h_bn[n] @ W_r[r] @ t_bn[n]
        col = jnp.sum(v * t_bn, axis=-1, keepdims=True)                  # (tn, 1)
        s = s + col * (lane == r).astype(jnp.float32)                    # place lane r
    out_ref[...] = jax.nn.sigmoid(s).astype(out_ref.dtype)


def score_function(h, t, rel_emb, W, bn_params, *, tn=256, use_bf16=True,
                   wr_chunk=2048):
    """Pallas implementation of GraphEncoderScore.score_function (eval mode)."""
    N, d = h.shape
    assert d == D and W.shape == (D, D, D)
    R = rel_emb.shape[0]

    # ---- host-side parameter prep (one-time; no per-edge compute) ----------------
    g0, b0, m0, v0 = bn_params[0], bn_params[1], bn_params[2], bn_params[3]
    g2, b2, m2, v2 = bn_params[4], bn_params[5], bn_params[6], bn_params[7]
    s0 = g0 / jnp.sqrt(v0 + BN_EPS)
    s2 = g2 / jnp.sqrt(v2 + BN_EPS)
    bn_f = jnp.stack([s0, b0 - m0 * s0, s2, b2 - m2 * s2])              # (4, D)
    bn_f = jnp.pad(bn_f, ((0, 0), (0, DP - D)))                         # pad: 0/0

    rel_p = jnp.pad(rel_emb.astype(jnp.float32), ((0, 0), (0, DP - D)))         # (R, DP)
    w_p = jnp.pad(W.astype(jnp.float32),
                  ((0, DP - D), (0, DP - D), (0, DP - D)))                      # (DP,)*3
    w_flat = w_p.reshape(DP, DP * DP)

    # ---- kernel 1: W_r = rel_emb @ W.view(D, D*D), tiled over output columns ------
    n_chunks = (DP * DP) // wr_chunk
    wr_flat = pl.pallas_call(
        _wmat_kernel,
        out_shape=jax.ShapeDtypeStruct((R, DP * DP), jnp.float32),
        grid_spec=pltpu.PrefetchScalarGridSpec(
            num_scalar_prefetch=0,
            grid=(n_chunks,),
            in_specs=[
                pl.BlockSpec((R, DP), lambda c: (0, 0)),           # rel (resident)
                pl.BlockSpec((DP, wr_chunk), lambda c: (0, c)),    # W column chunk
            ],
            out_specs=pl.BlockSpec((R, wr_chunk), lambda c: (0, c)),
        ),
        compiler_params=pltpu.CompilerParams(dimension_semantics=("parallel",)),
    )(rel_p, w_flat)
    w_r = wr_flat.reshape(R, DP, DP)
    if use_bf16:
        w_r = w_r.astype(jnp.bfloat16)        # MXU operand; accumulation stays f32

    # ---- kernel 2: tile the edge dimension; W_r (~128-256 KB) stays VMEM-resident -
    tn_eff = _round_up(min(tn, _round_up(max(N, 1), 8)), 8)
    n_pad = _round_up(max(N, 1), tn_eff)
    h_p = jnp.pad(h.astype(jnp.float32), ((0, n_pad - N), (0, DP - D)))
    t_p = jnp.pad(t.astype(jnp.float32), ((0, n_pad - N), (0, DP - D)))

    out_p = pl.pallas_call(
        _score_kernel,
        out_shape=jax.ShapeDtypeStruct((n_pad, R), jnp.float32),
        grid_spec=pltpu.PrefetchScalarGridSpec(
            num_scalar_prefetch=0,
            grid=(n_pad // tn_eff,),
            in_specs=[
                pl.BlockSpec((tn_eff, DP), lambda i: (i, 0)),      # h tile
                pl.BlockSpec((tn_eff, DP), lambda i: (i, 0)),      # t tile
                pl.BlockSpec((R, DP, DP), lambda i: (0, 0, 0)),    # W_r (resident)
                pl.BlockSpec((4, DP), lambda i: (0, 0)),           # folded BN params
            ],
            out_specs=pl.BlockSpec((tn_eff, R), lambda i: (i, 0)),
        ),
        compiler_params=pltpu.CompilerParams(dimension_semantics=("parallel",)),
    )(h_p, t_p, w_r, bn_f)
    return out_p[:N]


def init_params(key, output_dim):
    """Deterministic parameter init matching the module's __init__ shapes."""
    k_rel, k_w = jax.random.split(key)
    # xavier_uniform_ for relation_embedding (output_dim, 100)
    bound_rel = (6.0 / (output_dim + D)) ** 0.5
    rel_emb = jax.random.uniform(k_rel, (output_dim, D), jnp.float32,
                                 -bound_rel, bound_rel)
    # xavier_uniform_ for W (100, 100, 100): fan_in = fan_out = 100*100
    bound_w = (6.0 / (D * D + D * D)) ** 0.5
    W = jax.random.uniform(k_w, (D, D, D), jnp.float32, -bound_w, bound_w)
    # BatchNorm1d defaults: gamma=1, beta=0, running_mean=0, running_var=1
    bn_params = jnp.stack([
        jnp.ones((D,), jnp.float32),  jnp.zeros((D,), jnp.float32),
        jnp.zeros((D,), jnp.float32), jnp.ones((D,), jnp.float32),   # bn0
        jnp.ones((D,), jnp.float32),  jnp.zeros((D,), jnp.float32),
        jnp.zeros((D,), jnp.float32), jnp.ones((D,), jnp.float32),   # bn2
    ])
    return {"rel_emb": rel_emb, "W": W, "bn": bn_params}


def graph_encoder_score_forward(params, feature, heads_idx, tails_idx, *, tn=256):
    # TODO(synk): the RGCN gnn (self.gnn) is an external module whose definition is
    # not part of the reference snippet; this forward consumes node features directly.
    h = feature[heads_idx]   # glue gather == torch.vstack([feature[t][idx] ...])
    t = feature[tails_idx]
    return score_function(h, t, params["rel_emb"], params["W"], params["bn"], tn=tn)


def _reference_score(h, t, rel_emb, W, bn):
    h_bn = (h - bn[2]) / jnp.sqrt(bn[3] + BN_EPS) * bn[0] + bn[1]
    t_bn = (t - bn[6]) / jnp.sqrt(bn[7] + BN_EPS) * bn[4] + bn[5]
    W_mat = (rel_emb @ W.reshape(D, -1)).reshape(-1, D, D)
    s = jnp.einsum("ni,rij,nj->nr", h_bn, W_mat, t_bn)
    return jax.nn.sigmoid(s)


if __name__ == "__main__":
    key = jax.random.PRNGKey(0)
    k_param, k_feat, k_heads, k_tails = jax.random.split(key, 4)

    output_dim = 4     # R: number of relations
    num_nodes = 16
    num_edges = 24     # N; with tn=8 below -> 3 N-tiles, exercising the parallel axis

    params = init_params(k_param, output_dim)
    feature = jax.random.normal(k_feat, (num_nodes, D), jnp.float32)
    heads_idx = jax.random.randint(k_heads, (num_edges,), 0, num_nodes)
    tails_idx = jax.random.randint(k_tails, (num_edges,), 0, num_nodes)

    score = graph_encoder_score_forward(params, feature, heads_idx, tails_idx, tn=8)
    score = jax.block_until_ready(score)

    ref = _reference_score(feature[heads_idx], feature[tails_idx],
                           params["rel_emb"], params["W"], params["bn"])
    assert score.shape == (num_edges, output_dim)
    # bf16 MXU operands (f32 accumulation): tolerance loosened vs. pure-f32 check.
    assert jnp.allclose(score, ref, rtol=1e-2, atol=1e-2), \
        float(jnp.max(jnp.abs(score - ref)))
    print("KERNEL_OK")
</pallas_src>

<mosaic_0001>
module attributes {stable_mosaic.version = 11 : i64} {
  func.func @_wmat_kernel(%arg0: i32, %arg1: memref<4x128xf32, #tpu.memory_space<vmem>>, %arg2: memref<128x2048xf32, #tpu.memory_space<vmem>>, %arg3: memref<4x2048xf32, #tpu.memory_space<vmem>>) attributes {dimension_semantics = [#tpu.dimension_semantics<parallel>], iteration_bounds = array<i64: 8>, scalar_prefetch = 0 : i64, scratch_operands = 0 : i64, tpu.core_type = #tpu.core_type<tc>, window_params = [{pipeline_mode = #tpu.pipeline_mode<synchronous>, transform_indices = @transform_0, window_bounds = array<i64: 4, 128>}, {transform_indices = @transform_1, window_bounds = array<i64: 128, 2048>}, {transform_indices = @transform_2, window_bounds = array<i64: 4, 2048>}]} {
    %c0 = arith.constant 0 : index
    %c0_0 = arith.constant 0 : index
    %0 = vector.load %arg1[%c0, %c0_0] : memref<4x128xf32, #tpu.memory_space<vmem>>, vector<4x128xf32>
    %c0_1 = arith.constant 0 : index
    %c0_2 = arith.constant 0 : index
    %1 = vector.load %arg2[%c0_1, %c0_2] : memref<128x2048xf32, #tpu.memory_space<vmem>>, vector<128x2048xf32>
    %cst = arith.constant dense<0.000000e+00> : vector<4x2048xf32>
    %2 = tpu.matmul %0, %1, %cst {dimension_numbers = #tpu.dot_dimension_numbers<[1], [0], [0], [1], [0, 0, 1, 1], [], []>} : vector<4x128xf32>, vector<128x2048xf32>, vector<4x2048xf32> -> vector<4x2048xf32>
    %c0_3 = arith.constant 0 : index
    %c0_4 = arith.constant 0 : index
    %3 = vector.load %arg3[%c0_3, %c0_4] : memref<4x2048xf32, #tpu.memory_space<vmem>>, vector<4x2048xf32>
    tpu.vector_store %arg3[%c0_3, %c0_4], %2 {strides = array<i32>} : memref<4x2048xf32, #tpu.memory_space<vmem>>, vector<4x2048xf32>,
    return
  }
  func.func @transform_0(%arg0: i32) -> (i32, i32) {
    %c0_i32 = arith.constant 0 : i32
    %c0_i32_0 = arith.constant 0 : i32
    %c0_i32_1 = arith.constant 0 : i32
    return %c0_i32, %c0_i32_0 : i32, i32
  }
  func.func @transform_1(%arg0: i32) -> (i32, i32) {
    %c0_i32 = arith.constant 0 : i32
    %c0_i32_0 = arith.constant 0 : i32
    return %c0_i32, %arg0 : i32, i32
  }
  func.func @transform_2(%arg0: i32) -> (i32, i32) {
    %c0_i32 = arith.constant 0 : i32
    %c0_i32_0 = arith.constant 0 : i32
    return %c0_i32, %arg0 : i32, i32
  }
}

</mosaic_0001>

<llo_original>
// kernel: tpu_custom_call.1
$region0: #{tpu_custom_call.1}
  #allocation0 [shape = 'u32[]', space=smem, size = 0x4, offset = 0x4, fixed_abs, tag = 'smem constant byte address 0x4 - core index']
  #allocation1 [shape = 'u32[144,128]{1,0:T(1,128)}', space=vmem, size = 0x12000, scoped, tag = 'internal scratch']
  %s0 = inlined_call_operand.hbm [shape: f32[4,128], index: 0, kind: input, shape index: {}]
  %s1 = inlined_call_operand.hbm [shape: f32[128,16384], index: 1, kind: input, shape index: {}]
  %s2 = inlined_call_operand.hbm [shape: f32[4,16384], index: 2, kind: output, shape index: {}]
  %s3 = sld [smem:[#allocation0]]
  $region49: #{tpu_custom_call.1} parent=0
    _
  %s5 = ssub.s32 1, %s3
  %s6 = scalar_select 0, %s5, %s3
  $region1: #{tpu_custom_call.1} parent=0
    #allocation2 [shape = 'u8[2048]{0}', space=vmem, size = 0x800, scoped, tag = 'input window, operand 0, single buffered']
    #allocation3 [shape = 's32[2]{0}', space=sflag, size = 0x8, scoped, tag = 'scoped memory for tpu_custom_call.1']
    #allocation4 [shape = 's32[2]{0}', space=sflag, size = 0x8, scoped, tag = 'scoped memory for tpu_custom_call.1']
    #allocation5 [shape = 'u8[2097152]{0}', space=vmem, size = 0x200000, scoped, tag = 'input window, operand 1']
    #allocation6 [shape = 's32[2]{0}', space=sflag, size = 0x8, scoped, tag = 'scoped memory for tpu_custom_call.1']
    #allocation7 [shape = 'u8[65536]{0}', space=vmem, size = 0x10000, scoped, tag = 'output window, operand 0']
    %7 = vsyncpa [#allocation3], 0
    %8 = vsyncpa [#allocation6], 0
    %s9 = scalar_lea.sflag [#allocation6], 1
    %10 = vsyncpa %s9, 0
    %11 = vsyncpa [#allocation4], 0
    %s12 = scalar_lea.sflag [#allocation4], 1
    %13 = vsyncpa %s12, 0
    loop: start=0, step=1, limit=10
    $region2: #{tpu_custom_call.1} parent=1 // loop_pre_header
      _
    $region3: #{tpu_custom_call.1} parent=1 // loop_header
      %s15 = sphi 0, %s19
      %p16 = scmp.ge.s32.totalorder %s15, 10
      %s23 = sphi 0, %s23
      %s25 = sphi 0, %s23
      %s26 = sphi 0, %s25
      %s40 = sphi 0, %s26
      %s46 = sphi 0, %s48
      %s49 = sphi 0, %s46
      %s50 = sphi 0, %s49
      %s66 = sphi 0, %s50
      %s72 = sphi 0, %s74
      %s75 = sphi 0, %s72
      %s76 = sphi 0, %s75
      %s92 = sphi 0, %s76
    $region4: #{tpu_custom_call.1} parent=1 // loop_header_branch
      %18 = sbr.rel (%p16) target = $region8
    $region5: #{tpu_custom_call.1} parent=1 // loop_body
      %s20 = ssub.s32 %s15, 1
      %s21 = ssub.s32 %s15, 2
      %s22 = sadd.s32 %s15, 1
      %s24 = sadd.s32 %s23, 1
      %p27 = scmp.eq.s32.totalorder %s15, 7
      %p28 = scmp.ne.s32.totalorder %s23, %s25
      %p29 = scmp.eq.s32.totalorder %s15, 0
      %p30 = por %p28, %p29
      %p31 = scmp.ne.s32.totalorder %s23, %s25
      %p32 = scmp.eq.s32.totalorder %s20, 7
      %p33 = por %p31, %p32
      %p34 = scmp.ne.s32.totalorder %s25, %s26
      %p35 = scmp.eq.s32.totalorder %s20, 0
      %p36 = por %p34, %p35
      %p37 = scmp.ne.s32.totalorder %s25, %s26
      %p38 = scmp.eq.s32.totalorder %s21, 7
      %p39 = por %p37, %p38
      %p41 = scmp.ne.s32.totalorder %s26, %s40
      %p42 = scmp.eq.s32.totalorder %s21, 0
      %p43 = por %p41, %p42
      %s44 = ssub.s32 %s15, %s22
      %p45 = scmp.eq.s32.totalorder %s44, 0
      %s47 = sadd.s32 %s46, 1
      %s48 = scalar_select %p45, %s46, %s47
      %p51 = pneg %p45
      %p52 = scmp.eq.s32.totalorder %s15, 7
      %p53 = por %p51, %p52
      %p54 = scmp.ne.s32.totalorder %s46, %s49
      %p55 = scmp.eq.s32.totalorder %s15, 0
      %p56 = por %p54, %p55
      %p57 = scmp.ne.s32.totalorder %s46, %s49
      %p58 = scmp.eq.s32.totalorder %s20, 7
      %p59 = por %p57, %p58
      %p60 = scmp.ne.s32.totalorder %s49, %s50
      %p61 = scmp.eq.s32.totalorder %s20, 0
      %p62 = por %p60, %p61
      %p63 = scmp.ne.s32.totalorder %s49, %s50
      %p64 = scmp.eq.s32.totalorder %s21, 7
      %p65 = por %p63, %p64
      %p67 = scmp.ne.s32.totalorder %s50, %s66
      %p68 = scmp.eq.s32.totalorder %s21, 0
      %p69 = por %p67, %p68
      %s70 = ssub.s32 %s15, %s22
      %p71 = scmp.eq.s32.totalorder %s70, 0
      %s73 = sadd.s32 %s72, 1
      %s74 = scalar_select %p71, %s72, %s73
      %p77 = pneg %p71
      %p78 = scmp.eq.s32.totalorder %s15, 7
      %p79 = por %p77, %p78
      %p80 = scmp.ne.s32.totalorder %s72, %s75
      %p81 = scmp.eq.s32.totalorder %s15, 0
      %p82 = por %p80, %p81
      %p83 = scmp.ne.s32.totalorder %s72, %s75
      %p84 = scmp.eq.s32.totalorder %s20, 7
      %p85 = por %p83, %p84
      %p86 = scmp.ne.s32.totalorder %s75, %s76
      %p87 = scmp.eq.s32.totalorder %s20, 0
      %p88 = por %p86, %p87
      %p89 = scmp.ne.s32.totalorder %s75, %s76
      %p90 = scmp.eq.s32.totalorder %s21, 7
      %p91 = por %p89, %p90
      %p93 = scmp.ne.s32.totalorder %s76, %s92
      %p94 = scmp.eq.s32.totalorder %s21, 0
      %p95 = por %p93, %p94
      %p96 = scmp.le.s32.totalorder 1, %s15
      %p97 = scmp.lt.s32.totalorder %s15, 9
      %p98 = pnand %p96, %p97
      %p99 = pneg %p98
      // Predicated region
      $region9: #{tpu_custom_call.1} parent=5 // pred_check
        _
      $region10: #{tpu_custom_call.1} parent=5 // pred_check_branch
        %101 = sbr.rel (%p98) target = $region12
      $region11: #{tpu_custom_call.1} parent=5 // pred_region
        %s102 = ssub.s32 %s15, 1
        // Predicated region
        $region13: #{tpu_custom_call.1} parent=11 // pred_check
          %p103 = pneg %p36
        $region14: #{tpu_custom_call.1} parent=11 // pred_check_branch
          %105 = sbr.rel (%p103) target = $region16
        $region15: #{tpu_custom_call.1} parent=11 // pred_region
          %s107 = ssub.s32 64, 64
          %108 = vsyncadd [#allocation3], %s107
          %s110 = sshll.u32 [#allocation2], 4
          %s111 = int_to_ptr.vmem [resolvable:$true] %s110
          %113 = dma.hbm_to_vmem [thread:$0]  %s0, 64, %s111, [#allocation3]
        $region16: #{tpu_custom_call.1} parent=11 // pred_fallthru
          _
      $region12: #{tpu_custom_call.1} parent=5 // pred_fallthru
        _
      %p114 = scmp.lt.s32.totalorder %s15, 8
      // Predicated region
      $region17: #{tpu_custom_call.1} parent=5 // pred_check
        %p115 = pneg %p114
      $region18: #{tpu_custom_call.1} parent=5 // pred_check_branch
        %117 = sbr.rel (%p115) target = $region20
      $region19: #{tpu_custom_call.1} parent=5 // pred_region
        // Predicated region
        $region21: #{tpu_custom_call.1} parent=19 // pred_check
          %p118 = pneg %p56
        $region22: #{tpu_custom_call.1} parent=19 // pred_check_branch
          %120 = sbr.rel (%p118) target = $region24
        $region23: #{tpu_custom_call.1} parent=19 // pred_region
          %s121 = sand.u32 %s46, 1
          %s122 = scalar_lea.sflag [#allocation6], %s121
          %s123 = sand.u32 %s46, 1
          %s124 = smul.addr %s123, 2048
          %s125 = scalar_lea.vmem [#allocation5], %s124
          %s126 = smul.u32 16, %s15
          %s128 = ssub.s32 32768, 32768
          %129 = vsyncadd %s122, %s128
          %s130 = smul.addr %s126, 128
          %s131 = scalar_lea.hbm %s1, %s130
          %s132 = sshll.u32 %s125, 4
          %s133 = int_to_ptr.vmem [resolvable:$true] %s132
          %138 = dma.hbm_to_vmem [thread:$0]  %s131, 32768, %s133, %s122, 16384, 2048, 128
        $region24: #{tpu_custom_call.1} parent=19 // pred_fallthru
          _
      $region20: #{tpu_custom_call.1} parent=5 // pred_fallthru
        _
      %p139 = scmp.le.s32.totalorder 1, %s15
      %p140 = scmp.lt.s32.totalorder %s15, 9
      %p141 = pnand %p139, %p140
      %p142 = pneg %p141
      // Predicated region
      $region25: #{tpu_custom_call.1} parent=5 // pred_check
        _
      $region26: #{tpu_custom_call.1} parent=5 // pred_check_branch
        %144 = sbr.rel (%p141) target = $region28
      $region27: #{tpu_custom_call.1} parent=5 // pred_region
        %s145 = ssub.s32 %s15, 1
        // Predicated region
        $region29: #{tpu_custom_call.1} parent=27 // pred_check
          %p146 = pneg %p36
        $region30: #{tpu_custom_call.1} parent=27 // pred_check_branch
          %148 = sbr.rel (%p146) target = $region32
        $region31: #{tpu_custom_call.1} parent=27 // pred_region
          %149 = dma.done [#allocation3], 64
        $region32: #{tpu_custom_call.1} parent=27 // pred_fallthru
          _
        %s150 = sand.u32 %s49, 1
        %s151 = scalar_lea.sflag [#allocation6], %s150
        %s152 = sand.u32 %s49, 1
        %s153 = smul.addr %s152, 2048
        %s154 = scalar_lea.vmem [#allocation5], %s153
        // Predicated region
        $region33: #{tpu_custom_call.1} parent=27 // pred_check
          %p155 = pneg %p62
        $region34: #{tpu_custom_call.1} parent=27 // pred_check_branch
          %157 = sbr.rel (%p155) target = $region36
        $region35: #{tpu_custom_call.1} parent=27 // pred_region
          %158 = dma.done %s151, 32768
        $region36: #{tpu_custom_call.1} parent=27 // pred_fallthru
          _
        %p159 = pneg %p36
        %p160 = pneg %p33
        %s161 = sand.u32 %s49, 1
        %s162 = scalar_lea.sflag [#allocation6], %s161
        %s163 = sand.u32 %s49, 1
        %s164 = smul.addr %s163, 2048
        %s165 = scalar_lea.vmem [#allocation5], %s164
        %p166 = pneg %p62
        %p167 = pneg %p59
        %p168 = pneg %p88
        %p169 = pneg %p85
        %s170 = sand.u32 %s75, 1
        %s171 = scalar_lea.sflag [#allocation4], %s170
        %s172 = sand.u32 %s75, 1
        %s173 = smul.addr %s172, 64
        %s174 = scalar_lea.vmem [#allocation7], %s173
        %s175 = smul.u32 16, %s20
        %s176 = smul.u32 16, %s20
        %v177 = vld [vmem:[#allocation2] sm:$0xf]
        %v178 = vld [vmem:[%s154] sm:$0xff]
        %v179 = vld [vmem:[%s154 + $0x8] sm:$0xff]
        %v180 = vld [vmem:[%s154 + $0x10] sm:$0xff]
        %v181 = vld [vmem:[%s154 + $0x18] sm:$0xff]
        %v182 = vld [vmem:[%s154 + $0x20] sm:$0xff]
        %v183 = vld [vmem:[%s154 + $0x28] sm:$0xff]
        %v184 = vld [vmem:[%s154 + $0x30] sm:$0xff]
        %v185 = vld [vmem:[%s154 + $0x38] sm:$0xff]
        %v186 = vld [vmem:[%s154 + $0x40] sm:$0xff]
        %v187 = vld [vmem:[%s154 + $0x48] sm:$0xff]
        %v188 = vld [vmem:[%s154 + $0x50] sm:$0xff]
        %v189 = vld [vmem:[%s154 + $0x58] sm:$0xff]
        %v190 = vld [vmem:[%s154 + $0x60] sm:$0xff]
        %v191 = vld [vmem:[%s154 + $0x68] sm:$0xff]
        %v192 = vld [vmem:[%s154 + $0x70] sm:$0xff]
        %v193 = vld [vmem:[%s154 + $0x78] sm:$0xff]
        %v194 = vld [vmem:[%s154 + $0x80] sm:$0xff]
        %v195 = vld [vmem:[%s154 + $0x88] sm:$0xff]
        %v196 = vld [vmem:[%s154 + $0x90] sm:$0xff]
        %v197 = vld [vmem:[%s154 + $0x98] sm:$0xff]
        %v198 = vld [vmem:[%s154 + $0xa0] sm:$0xff]
        %v199 = vld [vmem:[%s154 + $0xa8] sm:$0xff]
        %v200 = vld [vmem:[%s154 + $0xb0] sm:$0xff]
        %v201 = vld [vmem:[%s154 + $0xb8] sm:$0xff]
        %v202 = vld [vmem:[%s154 + $0xc0] sm:$0xff]
        %v203 = vld [vmem:[%s154 + $0xc8] sm:$0xff]
        %v204 = vld [vmem:[%s154 + $0xd0] sm:$0xff]
        %v205 = vld [vmem:[%s154 + $0xd8] sm:$0xff]
        %v206 = vld [vmem:[%s154 + $0xe0] sm:$0xff]
        %v207 = vld [vmem:[%s154 + $0xe8] sm:$0xff]
        %v208 = vld [vmem:[%s154 + $0xf0] sm:$0xff]
        %v209 = vld [vmem:[%s154 + $0xf8] sm:$0xff]
        %v210 = vld [vmem:[%s154 + $0x100] sm:$0xff]
        %v211 = vld [vmem:[%s154 + $0x108] sm:$0xff]
        %v212 = vld [vmem:[%s154 + $0x110] sm:$0xff]
        %v213 = vld [vmem:[%s154 + $0x118] sm:$0xff]
        %v214 = vld [vmem:[%s154 + $0x120] sm:$0xff]
        %v215 = vld [vmem:[%s154 + $0x128] sm:$0xff]
        %v216 = vld [vmem:[%s154 + $0x130] sm:$0xff]
        %v217 = vld [vmem:[%s154 + $0x138] sm:$0xff]
        %v218 = vld [vmem:[%s154 + $0x140] sm:$0xff]
        %v219 = vld [vmem:[%s154 + $0x148] sm:$0xff]
        %v220 = vld [vmem:[%s154 + $0x150] sm:$0xff]
        %v221 = vld [vmem:[%s154 + $0x158] sm:$0xff]
        %v222 = vld [vmem:[%s154 + $0x160] sm:$0xff]
        %v223 = vld [vmem:[%s154 + $0x168] sm:$0xff]
        %v224 = vld [vmem:[%s154 + $0x170] sm:$0xff]
        %v225 = vld [vmem:[%s154 + $0x178] sm:$0xff]
        %v226 = vld [vmem:[%s154 + $0x180] sm:$0xff]
        %v227 = vld [vmem:[%s154 + $0x188] sm:$0xff]
        %v228 = vld [vmem:[%s154 + $0x190] sm:$0xff]
        %v229 = vld [vmem:[%s154 + $0x198] sm:$0xff]
        %v230 = vld [vmem:[%s154 + $0x1a0] sm:$0xff]
        %v231 = vld [vmem:[%s154 + $0x1a8] sm:$0xff]
        %v232 = vld [vmem:[%s154 + $0x1b0] sm:$0xff]
        %v233 = vld [vmem:[%s154 + $0x1b8] sm:$0xff]
        %v234 = vld [vmem:[%s154 + $0x1c0] sm:$0xff]
        %v235 = vld [vmem:[%s154 + $0x1c8] sm:$0xff]
        %v236 = vld [vmem:[%s154 + $0x1d0] sm:$0xff]
        %v237 = vld [vmem:[%s154 + $0x1d8] sm:$0xff]
        %v238 = vld [vmem:[%s154 + $0x1e0] sm:$0xff]
        %v239 = vld [vmem:[%s154 + $0x1e8] sm:$0xff]
        %v240 = vld [vmem:[%s154 + $0x1f0] sm:$0xff]
        %v241 = vld [vmem:[%s154 + $0x1f8] sm:$0xff]
        %v242 = vld [vmem:[%s154 + $0x200] sm:$0xff]
        %v243 = vld [vmem:[%s154 + $0x208] sm:$0xff]
        %v244 = vld [vmem:[%s154 + $0x210] sm:$0xff]
        %v245 = vld [vmem:[%s154 + $0x218] sm:$0xff]
        %v246 = vld [vmem:[%s154 + $0x220] sm:$0xff]
        %v247 = vld [vmem:[%s154 + $0x228] sm:$0xff]
        %v248 = vld [vmem:[%s154 + $0x230] sm:$0xff]
        %v249 = vld [vmem:[%s154 + $0x238] sm:$0xff]
        %v250 = vld [vmem:[%s154 + $0x240] sm:$0xff]
        %v251 = vld [vmem:[%s154 + $0x248] sm:$0xff]
        %v252 = vld [vmem:[%s154 + $0x250] sm:$0xff]
        %v253 = vld [vmem:[%s154 + $0x258] sm:$0xff]
        %v254 = vld [vmem:[%s154 + $0x260] sm:$0xff]
        %v255 = vld [vmem:[%s154 + $0x268] sm:$0xff]
        %v256 = vld [vmem:[%s154 + $0x270] sm:$0xff]
        %v257 = vld [vmem:[%s154 + $0x278] sm:$0xff]
        %v258 = vld [vmem:[%s154 + $0x280] sm:$0xff]
        %v259 = vld [vmem:[%s154 + $0x288] sm:$0xff]
        %v260 = vld [vmem:[%s154 + $0x290] sm:$0xff]
        %v261 = vld [vmem:[%s154 + $0x298] sm:$0xff]
        %v262 = vld [vmem:[%s154 + $0x2a0] sm:$0xff]
        %v263 = vld [vmem:[%s154 + $0x2a8] sm:$0xff]
        %v264 = vld [vmem:[%s154 + $0x2b0] sm:$0xff]
        %v265 = vld [vmem:[%s154 + $0x2b8] sm:$0xff]
        %v266 = vld [vmem:[%s154 + $0x2c0] sm:$0xff]
        %v267 = vld [vmem:[%s154 + $0x2c8] sm:$0xff]
        %v268 = vld [vmem:[%s154 + $0x2d0] sm:$0xff]
        %v269 = vld [vmem:[%s154 + $0x2d8] sm:$0xff]
        %v270 = vld [vmem:[%s154 + $0x2e0] sm:$0xff]
        %v271 = vld [vmem:[%s154 + $0x2e8] sm:$0xff]
        %v272 = vld [vmem:[%s154 + $0x2f0] sm:$0xff]
        %v273 = vld [vmem:[%s154 + $0x2f8] sm:$0xff]
        %v274 = vld [vmem:[%s154 + $0x300] sm:$0xff]
        %v275 = vld [vmem:[%s154 + $0x308] sm:$0xff]
        %v276 = vld [vmem:[%s154 + $0x310] sm:$0xff]
        %v277 = vld [vmem:[%s154 + $0x318] sm:$0xff]
        %v278 = vld [vmem:[%s154 + $0x320] sm:$0xff]
        %v279 = vld [vmem:[%s154 + $0x328] sm:$0xff]
        %v280 = vld [vmem:[%s154 + $0x330] sm:$0xff]
        %v281 = vld [vmem:[%s154 + $0x338] sm:$0xff]
        %v282 = vld [vmem:[%s154 + $0x340] sm:$0xff]
        %v283 = vld [vmem:[%s154 + $0x348] sm:$0xff]
        %v284 = vld [vmem:[%s154 + $0x350] sm:$0xff]
        %v285 = vld [vmem:[%s154 + $0x358] sm:$0xff]
        %v286 = vld [vmem:[%s154 + $0x360] sm:$0xff]
        %v287 = vld [vmem:[%s154 + $0x368] sm:$0xff]
        %v288 = vld [vmem:[%s154 + $0x370] sm:$0xff]
        %v289 = vld [vmem:[%s154 + $0x378] sm:$0xff]
        %v290 = vld [vmem:[%s154 + $0x380] sm:$0xff]
        %v291 = vld [vmem:[%s154 + $0x388] sm:$0xff]
        %v292 = vld [vmem:[%s154 + $0x390] sm:$0xff]
        %v293 = vld [vmem:[%s154 + $0x398] sm:$0xff]
        %v294 = vld [vmem:[%s154 + $0x3a0] sm:$0xff]
        %v295 = vld [vmem:[%s154 + $0x3a8] sm:$0xff]
        %v296 = vld [vmem:[%s154 + $0x3b0] sm:$0xff]
        %v297 = vld [vmem:[%s154 + $0x3b8] sm:$0xff]
        %v298 = vld [vmem:[%s154 + $0x3c0] sm:$0xff]
        %v299 = vld [vmem:[%s154 + $0x3c8] sm:$0xff]
        %v300 = vld [vmem:[%s154 + $0x3d0] sm:$0xff]
        %v301 = vld [vmem:[%s154 + $0x3d8] sm:$0xff]
        %v302 = vld [vmem:[%s154 + $0x3e0] sm:$0xff]
        %v303 = vld [vmem:[%s154 + $0x3e8] sm:$0xff]
        %v304 = vld [vmem:[%s154 + $0x3f0] sm:$0xff]
        %v305 = vld [vmem:[%s154 + $0x3f8] sm:$0xff]
        %v306 = vld [vmem:[%s154 + $0x400] sm:$0xff]
        %v307 = vld [vmem:[%s154 + $0x408] sm:$0xff]
        %v308 = vld [vmem:[%s154 + $0x410] sm:$0xff]
        %v309 = vld [vmem:[%s154 + $0x418] sm:$0xff]
        %v310 = vld [vmem:[%s154 + $0x420] sm:$0xff]
        %v311 = vld [vmem:[%s154 + $0x428] sm:$0xff]
        %v312 = vld [vmem:[%s154 + $0x430] sm:$0xff]
        %v313 = vld [vmem:[%s154 + $0x438] sm:$0xff]
        %v314 = vld [vmem:[%s154 + $0x440] sm:$0xff]
        %v315 = vld [vmem:[%s154 + $0x448] sm:$0xff]
        %v316 = vld [vmem:[%s154 + $0x450] sm:$0xff]
        %v317 = vld [vmem:[%s154 + $0x458] sm:$0xff]
        %v318 = vld [vmem:[%s154 + $0x460] sm:$0xff]
        %v319 = vld [vmem:[%s154 + $0x468] sm:$0xff]
        %v320 = vld [vmem:[%s154 + $0x470] sm:$0xff]
        %v321 = vld [vmem:[%s154 + $0x478] sm:$0xff]
        %v322 = vld [vmem:[%s154 + $0x480] sm:$0xff]
        %v323 = vld [vmem:[%s154 + $0x488] sm:$0xff]
        %v324 = vld [vmem:[%s154 + $0x490] sm:$0xff]
        %v325 = vld [vmem:[%s154 + $0x498] sm:$0xff]
        %v326 = vld [vmem:[%s154 + $0x4a0] sm:$0xff]
        %v327 = vld [vmem:[%s154 + $0x4a8] sm:$0xff]
        %v328 = vld [vmem:[%s154 + $0x4b0] sm:$0xff]
        %v329 = vld [vmem:[%s154 + $0x4b8] sm:$0xff]
        %v330 = vld [vmem:[%s154 + $0x4c0] sm:$0xff]
        %v331 = vld [vmem:[%s154 + $0x4c8] sm:$0xff]
        %v332 = vld [vmem:[%s154 + $0x4d0] sm:$0xff]
        %v333 = vld [vmem:[%s154 + $0x4d8] sm:$0xff]
        %v334 = vld [vmem:[%s154 + $0x4e0] sm:$0xff]
        %v335 = vld [vmem:[%s154 + $0x4e8] sm:$0xff]
        %v336 = vld [vmem:[%s154 + $0x4f0] sm:$0xff]
        %v337 = vld [vmem:[%s154 + $0x4f8] sm:$0xff]
        %v338 = vld [vmem:[%s154 + $0x500] sm:$0xff]
        %v339 = vld [vmem:[%s154 + $0x508] sm:$0xff]
        %v340 = vld [vmem:[%s154 + $0x510] sm:$0xff]
        %v341 = vld [vmem:[%s154 + $0x518] sm:$0xff]
        %v342 = vld [vmem:[%s154 + $0x520] sm:$0xff]
        %v343 = vld [vmem:[%s154 + $0x528] sm:$0xff]
        %v344 = vld [vmem:[%s154 + $0x530] sm:$0xff]
        %v345 = vld [vmem:[%s154 + $0x538] sm:$0xff]
        %v346 = vld [vmem:[%s154 + $0x540] sm:$0xff]
        %v347 = vld [vmem:[%s154 + $0x548] sm:$0xff]
        %v348 = vld [vmem:[%s154 + $0x550] sm:$0xff]
        %v349 = vld [vmem:[%s154 + $0x558] sm:$0xff]
        %v350 = vld [vmem:[%s154 + $0x560] sm:$0xff]
        %v351 = vld [vmem:[%s154 + $0x568] sm:$0xff]
        %v352 = vld [vmem:[%s154 + $0x570] sm:$0xff]
        %v353 = vld [vmem:[%s154 + $0x578] sm:$0xff]
        %v354 = vld [vmem:[%s154 + $0x580] sm:$0xff]
        %v355 = vld [vmem:[%s154 + $0x588] sm:$0xff]
        %v356 = vld [vmem:[%s154 + $0x590] sm:$0xff]
        %v357 = vld [vmem:[%s154 + $0x598] sm:$0xff]
        %v358 = vld [vmem:[%s154 + $0x5a0] sm:$0xff]
        %v359 = vld [vmem:[%s154 + $0x5a8] sm:$0xff]
        %v360 = vld [vmem:[%s154 + $0x5b0] sm:$0xff]
        %v361 = vld [vmem:[%s154 + $0x5b8] sm:$0xff]
        %v362 = vld [vmem:[%s154 + $0x5c0] sm:$0xff]
        %v363 = vld [vmem:[%s154 + $0x5c8] sm:$0xff]
        %v364 = vld [vmem:[%s154 + $0x5d0] sm:$0xff]
        %v365 = vld [vmem:[%s154 + $0x5d8] sm:$0xff]
        %v366 = vld [vmem:[%s154 + $0x5e0] sm:$0xff]
        %v367 = vld [vmem:[%s154 + $0x5e8] sm:$0xff]
        %v368 = vld [vmem:[%s154 + $0x5f0] sm:$0xff]
        %v369 = vld [vmem:[%s154 + $0x5f8] sm:$0xff]
        %v370 = vld [vmem:[%s154 + $0x600] sm:$0xff]
        %v371 = vld [vmem:[%s154 + $0x608] sm:$0xff]
        %v372 = vld [vmem:[%s154 + $0x610] sm:$0xff]
        %v373 = vld [vmem:[%s154 + $0x618] sm:$0xff]
        %v374 = vld [vmem:[%s154 + $0x620] sm:$0xff]
        %v375 = vld [vmem:[%s154 + $0x628] sm:$0xff]
        %v376 = vld [vmem:[%s154 + $0x630] sm:$0xff]
        %v377 = vld [vmem:[%s154 + $0x638] sm:$0xff]
        %v378 = vld [vmem:[%s154 + $0x640] sm:$0xff]
        %v379 = vld [vmem:[%s154 + $0x648] sm:$0xff]
        %v380 = vld [vmem:[%s154 + $0x650] sm:$0xff]
        %v381 = vld [vmem:[%s154 + $0x658] sm:$0xff]
        %v382 = vld [vmem:[%s154 + $0x660] sm:$0xff]
        %v383 = vld [vmem:[%s154 + $0x668] sm:$0xff]
        %v384 = vld [vmem:[%s154 + $0x670] sm:$0xff]
        %v385 = vld [vmem:[%s154 + $0x678] sm:$0xff]
        %v386 = vld [vmem:[%s154 + $0x680] sm:$0xff]
        %v387 = vld [vmem:[%s154 + $0x688] sm:$0xff]
        %v388 = vld [vmem:[%s154 + $0x690] sm:$0xff]
        %v389 = vld [vmem:[%s154 + $0x698] sm:$0xff]
        %v390 = vld [vmem:[%s154 + $0x6a0] sm:$0xff]
        %v391 = vld [vmem:[%s154 + $0x6a8] sm:$0xff]
        %v392 = vld [vmem:[%s154 + $0x6b0] sm:$0xff]
        %v393 = vld [vmem:[%s154 + $0x6b8] sm:$0xff]
        %v394 = vld [vmem:[%s154 + $0x6c0] sm:$0xff]
        %v395 = vld [vmem:[%s154 + $0x6c8] sm:$0xff]
        %v396 = vld [vmem:[%s154 + $0x6d0] sm:$0xff]
        %v397 = vld [vmem:[%s154 + $0x6d8] sm:$0xff]
        %v398 = vld [vmem:[%s154 + $0x6e0] sm:$0xff]
        %v399 = vld [vmem:[%s154 + $0x6e8] sm:$0xff]
        %v400 = vld [vmem:[%s154 + $0x6f0] sm:$0xff]
        %v401 = vld [vmem:[%s154 + $0x6f8] sm:$0xff]
        %v402 = vld [vmem:[%s154 + $0x700] sm:$0xff]
        %v403 = vld [vmem:[%s154 + $0x708] sm:$0xff]
        %v404 = vld [vmem:[%s154 + $0x710] sm:$0xff]
        %v405 = vld [vmem:[%s154 + $0x718] sm:$0xff]
        %v406 = vld [vmem:[%s154 + $0x720] sm:$0xff]
        %v407 = vld [vmem:[%s154 + $0x728] sm:$0xff]
        %v408 = vld [vmem:[%s154 + $0x730] sm:$0xff]
        %v409 = vld [vmem:[%s154 + $0x738] sm:$0xff]
        %v410 = vld [vmem:[%s154 + $0x740] sm:$0xff]
        %v411 = vld [vmem:[%s154 + $0x748] sm:$0xff]
        %v412 = vld [vmem:[%s154 + $0x750] sm:$0xff]
        %v413 = vld [vmem:[%s154 + $0x758] sm:$0xff]
        %v414 = vld [vmem:[%s154 + $0x760] sm:$0xff]
        %v415 = vld [vmem:[%s154 + $0x768] sm:$0xff]
        %v416 = vld [vmem:[%s154 + $0x770] sm:$0xff]
        %v417 = vld [vmem:[%s154 + $0x778] sm:$0xff]
        %v418 = vld [vmem:[%s154 + $0x780] sm:$0xff]
        %v419 = vld [vmem:[%s154 + $0x788] sm:$0xff]
        %v420 = vld [vmem:[%s154 + $0x790] sm:$0xff]
        %v421 = vld [vmem:[%s154 + $0x798] sm:$0xff]
        %v422 = vld [vmem:[%s154 + $0x7a0] sm:$0xff]
        %v423 = vld [vmem:[%s154 + $0x7a8] sm:$0xff]
        %v424 = vld [vmem:[%s154 + $0x7b0] sm:$0xff]
        %v425 = vld [vmem:[%s154 + $0x7b8] sm:$0xff]
        %v426 = vld [vmem:[%s154 + $0x7c0] sm:$0xff]
        %v427 = vld [vmem:[%s154 + $0x7c8] sm:$0xff]
        %v428 = vld [vmem:[%s154 + $0x7d0] sm:$0xff]
        %v429 = vld [vmem:[%s154 + $0x7d8] sm:$0xff]
        %v430 = vld [vmem:[%s154 + $0x7e0] sm:$0xff]
        %v431 = vld [vmem:[%s154 + $0x7e8] sm:$0xff]
        %v432 = vld [vmem:[%s154 + $0x7f0] sm:$0xff]
        %v433 = vld [vmem:[%s154 + $0x7f8] sm:$0xff]
        %434 = vmatprep.subr.mxu0 %v419
        %435 = vmatpush1.msra.mxu0 %v418
        %436 = vmatprep.subr.mxu0 %v403
        %437 = vmatpush1.msra.mxu0 %v402
        %438 = vmatprep.subr.mxu0 %v387
        %439 = vmatpush1.msra.mxu0 %v386
        %440 = vmatprep.subr.mxu0 %v371
        %441 = vmatpush1.msra.mxu0 %v370
        %442 = vmatprep.subr.mxu0 %v355
        %443 = vmatpush1.msra.mxu0 %v354
        %444 = vmatprep.subr.mxu0 %v339
        %445 = vmatpush1.msra.mxu0 %v338
        %446 = vmatprep.subr.mxu0 %v323
        %447 = vmatpush1.msra.mxu0 %v322
        %448 = vmatprep.subr.mxu0 %v307
        %449 = vmatpush1.msra.mxu0 %v306
        %450 = vmatprep.subr.mxu0 %v291
        %451 = vmatpush1.msra.mxu0 %v290
        %452 = vmatprep.subr.mxu0 %v275
        %453 = vmatpush1.msra.mxu0 %v274
        %454 = vmatprep.subr.mxu0 %v259
        %455 = vmatpush1.msra.mxu0 %v258
        %456 = vmatprep.subr.mxu0 %v243
        %457 = vmatpush1.msra.mxu0 %v242
        %458 = vmatprep.subr.mxu0 %v227
        %459 = vmatpush1.msra.mxu0 %v226
        %460 = vmatprep.subr.mxu0 %v211
        %461 = vmatpush1.msra.mxu0 %v210
        %462 = vmatprep.subr.mxu0 %v195
        %463 = vmatpush1.msra.mxu0 %v194
        %464 = vmatprep.subr.mxu0 %v179
        %465 = vmatpush1.msra.mxu0 %v178
        %466 = vmatprep.subr.mxu0 0.0
        %467 = vmatpush2.msra.mxu0 0.0
        %468 = vmatprep.subr.mxu0 0.0
        %469 = vmatpush2.msra.mxu0 0.0
        %470 = vmatprep.subr.mxu0 0.0
        %471 = vmatpush2.msra.mxu0 0.0
        %472 = vmatprep.subr.mxu0 0.0
        %473 = vmatpush2.msra.mxu0 0.0
        %474 = vmatprep.subr.mxu0 0.0
        %475 = vmatpush2.msra.mxu0 0.0
        %476 = vmatprep.subr.mxu0 0.0
        %477 = vmatpush2.msra.mxu0 0.0
        %478 = vmatprep.subr.mxu0 0.0
        %479 = vmatpush2.msra.mxu0 0.0
        %480 = vmatprep.subr.mxu0 0.0
        %481 = vmatpush2.msra.mxu0 0.0
        %482 = vmatprep.subr.mxu0 0.0
        %483 = vmatpush2.msra.mxu0 0.0
        %484 = vmatprep.subr.mxu0 0.0
        %485 = vmatpush2.msra.mxu0 0.0
        %486 = vmatprep.subr.mxu0 0.0
        %487 = vmatpush2.msra.mxu0 0.0
        %488 = vmatprep.subr.mxu0 0.0
        %489 = vmatpush2.msra.mxu0 0.0
        %490 = vmatprep.subr.mxu0 0.0
        %491 = vmatpush2.msra.mxu0 0.0
        %492 = vmatprep.subr.mxu0 0.0
        %493 = vmatpush2.msra.mxu0 0.0
        %494 = vmatprep.subr.mxu0 0.0
        %495 = vmatpush2.msra.mxu0 0.0
        %496 = vmatprep.subr.mxu0 0.0
        %497 = vmatpush2.msra.mxu0 0.0
        %498 = vmatprep.mubr.f32.mxu0 0.0
        %499 = vmatmul.mubr.f32.gmra.mxu0 %v177
        %v500 = vpop.f32.mrf.mxu0
        %v501 = vadd.f32 0.0, %v500
        %v502 = vpop.f32.mrf.mxu0
        %v503 = vadd.f32 0.0, %v502
        %504 = vdwg.mxu0
        %505 = vmatprep.subr.mxu0 %v421
        %506 = vmatpush1.msra.mxu0 %v420
        %507 = vmatprep.subr.mxu0 %v405
        %508 = vmatpush1.msra.mxu0 %v404
        %509 = vmatprep.subr.mxu0 %v389
        %510 = vmatpush1.msra.mxu0 %v388
        %511 = vmatprep.subr.mxu0 %v373
        %512 = vmatpush1.msra.mxu0 %v372
        %513 = vmatprep.subr.mxu0 %v357
        %514 = vmatpush1.msra.mxu0 %v356
        %515 = vmatprep.subr.mxu0 %v341
        %516 = vmatpush1.msra.mxu0 %v340
        %517 = vmatprep.subr.mxu0 %v325
        %518 = vmatpush1.msra.mxu0 %v324
        %519 = vmatprep.subr.mxu0 %v309
        %520 = vmatpush1.msra.mxu0 %v308
        %521 = vmatprep.subr.mxu0 %v293
        %522 = vmatpush1.msra.mxu0 %v292
        %523 = vmatprep.subr.mxu0 %v277
        %524 = vmatpush1.msra.mxu0 %v276
        %525 = vmatprep.subr.mxu0 %v261
        %526 = vmatpush1.msra.mxu0 %v260
        %527 = vmatprep.subr.mxu0 %v245
        %528 = vmatpush1.msra.mxu0 %v244
        %529 = vmatprep.subr.mxu0 %v229
        %530 = vmatpush1.msra.mxu0 %v228
        %531 = vmatprep.subr.mxu0 %v213
        %532 = vmatpush1.msra.mxu0 %v212
        %533 = vmatprep.subr.mxu0 %v197
        %534 = vmatpush1.msra.mxu0 %v196
        %535 = vmatprep.subr.mxu0 %v181
        %536 = vmatpush1.msra.mxu0 %v180
        %537 = vmatprep.subr.mxu0 0.0
        %538 = vmatpush2.msra.mxu0 0.0
        %539 = vmatprep.subr.mxu0 0.0
        %540 = vmatpush2.msra.mxu0 0.0
        %541 = vmatprep.subr.mxu0 0.0
        %542 = vmatpush2.msra.mxu0 0.0
        %543 = vmatprep.subr.mxu0 0.0
        %544 = vmatpush2.msra.mxu0 0.0
        %545 = vmatprep.subr.mxu0 0.0
        %546 = vmatpush2.msra.mxu0 0.0
        %547 = vmatprep.subr.mxu0 0.0
        %548 = vmatpush2.msra.mxu0 0.0
        %549 = vmatprep.subr.mxu0 0.0
        %550 = vmatpush2.msra.mxu0 0.0
        %551 = vmatprep.subr.mxu0 0.0
        %552 = vmatpush2.msra.mxu0 0.0
        %553 = vmatprep.subr.mxu0 0.0
        %554 = vmatpush2.msra.mxu0 0.0
        %555 = vmatprep.subr.mxu0 0.0
        %556 = vmatpush2.msra.mxu0 0.0
        %557 = vmatprep.subr.mxu0 0.0
        %558 = vmatpush2.msra.mxu0 0.0
        %559 = vmatprep.subr.mxu0 0.0
        %560 = vmatpush2.msra.mxu0 0.0
        %561 = vmatprep.subr.mxu0 0.0
        %562 = vmatpush2.msra.mxu0 0.0
        %563 = vmatprep.subr.mxu0 0.0
        %564 = vmatpush2.msra.mxu0 0.0
        %565 = vmatprep.subr.mxu0 0.0
        %566 = vmatpush2.msra.mxu0 0.0
        %567 = vmatprep.subr.mxu0 0.0
        %568 = vmatpush2.msra.mxu0 0.0
        %569 = vmatprep.mubr.f32.mxu0 0.0
        %570 = vmatmul.mubr.f32.gmra.mxu0 %v177
        %v571 = vpop.f32.mrf.mxu0
        %v572 = vadd.f32 0.0, %v571
        %v573 = vpop.f32.mrf.mxu0
        %v574 = vadd.f32 0.0, %v573
        %575 = vdwg.mxu0
        %576 = vmatprep.subr.mxu0 %v423
        %577 = vmatpush1.msra.mxu0 %v422
        %578 = vmatprep.subr.mxu0 %v407
        %579 = vmatpush1.msra.mxu0 %v406
        %580 = vmatprep.subr.mxu0 %v391
        %581 = vmatpush1.msra.mxu0 %v390
        %582 = vmatprep.subr.mxu0 %v375
        %583 = vmatpush1.msra.mxu0 %v374
        %584 = vmatprep.subr.mxu0 %v359
        %585 = vmatpush1.msra.mxu0 %v358
        %586 = vmatprep.subr.mxu0 %v343
        %587 = vmatpush1.msra.mxu0 %v342
        %588 = vmatprep.subr.mxu0 %v327
        %589 = vmatpush1.msra.mxu0 %v326
        %590 = vmatprep.subr.mxu0 %v311
        %591 = vmatpush1.msra.mxu0 %v310
        %592 = vmatprep.subr.mxu0 %v295
        %593 = vmatpush1.msra.mxu0 %v294
        %594 = vmatprep.subr.mxu0 %v279
        %595 = vmatpush1.msra.mxu0 %v278
        %596 = vmatprep.subr.mxu0 %v263
        %597 = vmatpush1.msra.mxu0 %v262
        %598 = vmatprep.subr.mxu0 %v247
        %599 = vmatpush1.msra.mxu0 %v246
        %600 = vmatprep.subr.mxu0 %v231
        %601 = vmatpush1.msra.mxu0 %v230
        %602 = vmatprep.subr.mxu0 %v215
        %603 = vmatpush1.msra.mxu0 %v214
        %604 = vmatprep.subr.mxu0 %v199
        %605 = vmatpush1.msra.mxu0 %v198
        %606 = vmatprep.subr.mxu0 %v183
        %607 = vmatpush1.msra.mxu0 %v182
        %608 = vmatprep.subr.mxu0 0.0
        %609 = vmatpush2.msra.mxu0 0.0
        %610 = vmatprep.subr.mxu0 0.0
        %611 = vmatpush2.msra.mxu0 0.0
        %612 = vmatprep.subr.mxu0 0.0
        %613 = vmatpush2.msra.mxu0 0.0
        %614 = vmatprep.subr.mxu0 0.0
        %615 = vmatpush2.msra.mxu0 0.0
        %616 = vmatprep.subr.mxu0 0.0
        %617 = vmatpush2.msra.mxu0 0.0
        %618 = vmatprep.subr.mxu0 0.0
        %619 = vmatpush2.msra.mxu0 0.0
        %620 = vmatprep.subr.mxu0 0.0
        %621 = vmatpush2.msra.mxu0 0.0
        %622 = vmatprep.subr.mxu0 0.0
        %623 = vmatpush2.msra.mxu0 0.0
        %624 = vmatprep.subr.mxu0 0.0
        %625 = vmatpush2.msra.mxu0 0.0
        %626 = vmatprep.subr.mxu0 0.0
        %627 = vmatpush2.msra.mxu0 0.0
        %628 = vmatprep.subr.mxu0 0.0
        %629 = vmatpush2.msra.mxu0 0.0
        %630 = vmatprep.subr.mxu0 0.0
        %631 = vmatpush2.msra.mxu0 0.0
        %632 = vmatprep.subr.mxu0 0.0
        %633 = vmatpush2.msra.mxu0 0.0
        %634 = vmatprep.subr.mxu0 0.0
        %635 = vmatpush2.msra.mxu0 0.0
        %636 = vmatprep.subr.mxu0 0.0
        %637 = vmatpush2.msra.mxu0 0.0
        %638 = vmatprep.subr.mxu0 0.0
        %639 = vmatpush2.msra.mxu0 0.0
        %640 = vmatprep.mubr.f32.mxu0 0.0
        %641 = vmatmul.mubr.f32.gmra.mxu0 %v177
        %v642 = vpop.f32.mrf.mxu0
        %v643 = vadd.f32 0.0, %v642
        %v644 = vpop.f32.mrf.mxu0
        %v645 = vadd.f32 0.0, %v644
        %646 = vdwg.mxu0
        %647 = vmatprep.subr.mxu0 %v425
        %648 = vmatpush1.msra.mxu0 %v424
        %649 = vmatprep.subr.mxu0 %v409
        %650 = vmatpush1.msra.mxu0 %v408
        %651 = vmatprep.subr.mxu0 %v393
        %652 = vmatpush1.msra.mxu0 %v392
        %653 = vmatprep.subr.mxu0 %v377
        %654 = vmatpush1.msra.mxu0 %v376
        %655 = vmatprep.subr.mxu0 %v361
        %656 = vmatpush1.msra.mxu0 %v360
        %657 = vmatprep.subr.mxu0 %v345
        %658 = vmatpush1.msra.mxu0 %v344
        %659 = vmatprep.subr.mxu0 %v329
        %660 = vmatpush1.msra.mxu0 %v328
        %661 = vmatprep.subr.mxu0 %v313
        %662 = vmatpush1.msra.mxu0 %v312
        %663 = vmatprep.subr.mxu0 %v297
        %664 = vmatpush1.msra.mxu0 %v296
        %665 = vmatprep.subr.mxu0 %v281
        %666 = vmatpush1.msra.mxu0 %v280
        %667 = vmatprep.subr.mxu0 %v265
        %668 = vmatpush1.msra.mxu0 %v264
        %669 = vmatprep.subr.mxu0 %v249
        %670 = vmatpush1.msra.mxu0 %v248
        %671 = vmatprep.subr.mxu0 %v233
        %672 = vmatpush1.msra.mxu0 %v232
        %673 = vmatprep.subr.mxu0 %v217
        %674 = vmatpush1.msra.mxu0 %v216
        %675 = vmatprep.subr.mxu0 %v201
        %676 = vmatpush1.msra.mxu0 %v200
        %677 = vmatprep.subr.mxu0 %v185
        %678 = vmatpush1.msra.mxu0 %v184
        %679 = vmatprep.subr.mxu0 0.0
        %680 = vmatpush2.msra.mxu0 0.0
        %681 = vmatprep.subr.mxu0 0.0
        %682 = vmatpush2.msra.mxu0 0.0
        %683 = vmatprep.subr.mxu0 0.0
        %684 = vmatpush2.msra.mxu0 0.0
        %685 = vmatprep.subr.mxu0 0.0
        %686 = vmatpush2.msra.mxu0 0.0
        %687 = vmatprep.subr.mxu0 0.0
        %688 = vmatpush2.msra.mxu0 0.0
        %689 = vmatprep.subr.mxu0 0.0
        %690 = vmatpush2.msra.mxu0 0.0
        %691 = vmatprep.subr.mxu0 0.0
        %692 = vmatpush2.msra.mxu0 0.0
        %693 = vmatprep.subr.mxu0 0.0
        %694 = vmatpush2.msra.mxu0 0.0
        %695 = vmatprep.subr.mxu0 0.0
        %696 = vmatpush2.msra.mxu0 0.0
        %697 = vmatprep.subr.mxu0 0.0
        %698 = vmatpush2.msra.mxu0 0.0
        %699 = vmatprep.subr.mxu0 0.0
        %700 = vmatpush2.msra.mxu0 0.0
        %701 = vmatprep.subr.mxu0 0.0
        %702 = vmatpush2.msra.mxu0 0.0
        %703 = vmatprep.subr.mxu0 0.0
        %704 = vmatpush2.msra.mxu0 0.0
        %705 = vmatprep.subr.mxu0 0.0
        %706 = vmatpush2.msra.mxu0 0.0
        %707 = vmatprep.subr.mxu0 0.0
        %708 = vmatpush2.msra.mxu0 0.0
        %709 = vmatprep.subr.mxu0 0.0
        %710 = vmatpush2.msra.mxu0 0.0
        %711 = vmatprep.mubr.f32.mxu0 0.0
        %712 = vmatmul.mubr.f32.gmra.mxu0 %v177
        %v713 = vpop.f32.mrf.mxu0
        %v714 = vadd.f32 0.0, %v713
        %v715 = vpop.f32.mrf.mxu0
        %v716 = vadd.f32 0.0, %v715
        %717 = vdwg.mxu0
        %718 = vmatprep.subr.mxu0 %v427
        %719 = vmatpush1.msra.mxu0 %v426
        %720 = vmatprep.subr.mxu0 %v411
        %721 = vmatpush1.msra.mxu0 %v410
        %722 = vmatprep.subr.mxu0 %v395
        %723 = vmatpush1.msra.mxu0 %v394
        %724 = vmatprep.subr.mxu0 %v379
        %725 = vmatpush1.msra.mxu0 %v378
        %726 = vmatprep.subr.mxu0 %v363
        %727 = vmatpush1.msra.mxu0 %v362
        %728 = vmatprep.subr.mxu0 %v347
        %729 = vmatpush1.msra.mxu0 %v346
        %730 = vmatprep.subr.mxu0 %v331
        %731 = vmatpush1.msra.mxu0 %v330
        %732 = vmatprep.subr.mxu0 %v315
        %733 = vmatpush1.msra.mxu0 %v314
        %734 = vmatprep.subr.mxu0 %v299
        %735 = vmatpush1.msra.mxu0 %v298
        %736 = vmatprep.subr.mxu0 %v283
        %737 = vmatpush1.msra.mxu0 %v282
        %738 = vmatprep.subr.mxu0 %v267
        %739 = vmatpush1.msra.mxu0 %v266
        %740 = vmatprep.subr.mxu0 %v251
        %741 = vmatpush1.msra.mxu0 %v250
        %742 = vmatprep.subr.mxu0 %v235
        %743 = vmatpush1.msra.mxu0 %v234
        %744 = vmatprep.subr.mxu0 %v219
        %745 = vmatpush1.msra.mxu0 %v218
        %746 = vmatprep.subr.mxu0 %v203
        %747 = vmatpush1.msra.mxu0 %v202
        %748 = vmatprep.subr.mxu0 %v187
        %749 = vmatpush1.msra.mxu0 %v186
        %750 = vmatprep.subr.mxu0 0.0
        %751 = vmatpush2.msra.mxu0 0.0
        %752 = vmatprep.subr.mxu0 0.0
        %753 = vmatpush2.msra.mxu0 0.0
        %754 = vmatprep.subr.mxu0 0.0
        %755 = vmatpush2.msra.mxu0 0.0
        %756 = vmatprep.subr.mxu0 0.0
        %757 = vmatpush2.msra.mxu0 0.0
        %758 = vmatprep.subr.mxu0 0.0
        %759 = vmatpush2.msra.mxu0 0.0
        %760 = vmatprep.subr.mxu0 0.0
        %761 = vmatpush2.msra.mxu0 0.0
        %762 = vmatprep.subr.mxu0 0.0
        %763 = vmatpush2.msra.mxu0 0.0
        %764 = vmatprep.subr.mxu0 0.0
        %765 = vmatpush2.msra.mxu0 0.0
        %766 = vmatprep.subr.mxu0 0.0
        %767 = vmatpush2.msra.mxu0 0.0
        %768 = vmatprep.subr.mxu0 0.0
        %769 = vmatpush2.msra.mxu0 0.0
        %770 = vmatprep.subr.mxu0 0.0
        %771 = vmatpush2.msra.mxu0 0.0
        %772 = vmatprep.subr.mxu0 0.0
        %773 = vmatpush2.msra.mxu0 0.0
        %774 = vmatprep.subr.mxu0 0.0
        %775 = vmatpush2.msra.mxu0 0.0
        %776 = vmatprep.subr.mxu0 0.0
        %777 = vmatpush2.msra.mxu0 0.0
        %778 = vmatprep.subr.mxu0 0.0
        %779 = vmatpush2.msra.mxu0 0.0
        %780 = vmatprep.subr.mxu0 0.0
        %781 = vmatpush2.msra.mxu0 0.0
        %782 = vmatprep.mubr.f32.mxu0 0.0
        %783 = vmatmul.mubr.f32.gmra.mxu0 %v177
        %v784 = vpop.f32.mrf.mxu0
        %v785 = vadd.f32 0.0, %v784
        %v786 = vpop.f32.mrf.mxu0
        %v787 = vadd.f32 0.0, %v786
        %788 = vdwg.mxu0
        %789 = vmatprep.subr.mxu0 %v429
        %790 = vmatpush1.msra.mxu0 %v428
        %791 = vmatprep.subr.mxu0 %v413
        %792 = vmatpush1.msra.mxu0 %v412
        %793 = vmatprep.subr.mxu0 %v397
        %794 = vmatpush1.msra.mxu0 %v396
        %795 = vmatprep.subr.mxu0 %v381
        %796 = vmatpush1.msra.mxu0 %v380
        %797 = vmatprep.subr.mxu0 %v365
        %798 = vmatpush1.msra.mxu0 %v364
        %799 = vmatprep.subr.mxu0 %v349
        %800 = vmatpush1.msra.mxu0 %v348
        %801 = vmatprep.subr.mxu0 %v333
        %802 = vmatpush1.msra.mxu0 %v332
        %803 = vmatprep.subr.mxu0 %v317
        %804 = vmatpush1.msra.mxu0 %v316
        %805 = vmatprep.subr.mxu0 %v301
        %806 = vmatpush1.msra.mxu0 %v300
        %807 = vmatprep.subr.mxu0 %v285
        %808 = vmatpush1.msra.mxu0 %v284
        %809 = vmatprep.subr.mxu0 %v269
        %810 = vmatpush1.msra.mxu0 %v268
        %811 = vmatprep.subr.mxu0 %v253
        %812 = vmatpush1.msra.mxu0 %v252
        %813 = vmatprep.subr.mxu0 %v237
        %814 = vmatpush1.msra.mxu0 %v236
        %815 = vmatprep.subr.mxu0 %v221
        %816 = vmatpush1.msra.mxu0 %v220
        %817 = vmatprep.subr.mxu0 %v205
        %818 = vmatpush1.msra.mxu0 %v204
        %819 = vmatprep.subr.mxu0 %v189
        %820 = vmatpush1.msra.mxu0 %v188
        %821 = vmatprep.subr.mxu0 0.0
        %822 = vmatpush2.msra.mxu0 0.0
        %823 = vmatprep.subr.mxu0 0.0
        %824 = vmatpush2.msra.mxu0 0.0
        %825 = vmatprep.subr.mxu0 0.0
        %826 = vmatpush2.msra.mxu0 0.0
        %827 = vmatprep.subr.mxu0 0.0
        %828 = vmatpush2.msra.mxu0 0.0
        %829 = vmatprep.subr.mxu0 0.0
        %830 = vmatpush2.msra.mxu0 0.0
        %831 = vmatprep.subr.mxu0 0.0
        %832 = vmatpush2.msra.mxu0 0.0
        %833 = vmatprep.subr.mxu0 0.0
        %834 = vmatpush2.msra.mxu0 0.0
        %835 = vmatprep.subr.mxu0 0.0
        %836 = vmatpush2.msra.mxu0 0.0
        %837 = vmatprep.subr.mxu0 0.0
        %838 = vmatpush2.msra.mxu0 0.0
        %839 = vmatprep.subr.mxu0 0.0
        %840 = vmatpush2.msra.mxu0 0.0
        %841 = vmatprep.subr.mxu0 0.0
        %842 = vmatpush2.msra.mxu0 0.0
        %843 = vmatprep.subr.mxu0 0.0
        %844 = vmatpush2.msra.mxu0 0.0
        %845 = vmatprep.subr.mxu0 0.0
        %846 = vmatpush2.msra.mxu0 0.0
        %847 = vmatprep.subr.mxu0 0.0
        %848 = vmatpush2.msra.mxu0 0.0
        %849 = vmatprep.subr.mxu0 0.0
        %850 = vmatpush2.msra.mxu0 0.0
        %851 = vmatprep.subr.mxu0 0.0
        %852 = vmatpush2.msra.mxu0 0.0
        %853 = vmatprep.mubr.f32.mxu0 0.0
        %854 = vmatmul.mubr.f32.gmra.mxu0 %v177
        %v855 = vpop.f32.mrf.mxu0
        %v856 = vadd.f32 0.0, %v855
        %v857 = vpop.f32.mrf.mxu0
        %v858 = vadd.f32 0.0, %v857
        %859 = vdwg.mxu0
        %860 = vmatprep.subr.mxu0 %v431
        %861 = vmatpush1.msra.mxu0 %v430
        %862 = vmatprep.subr.mxu0 %v415
        %863 = vmatpush1.msra.mxu0 %v414
        %864 = vmatprep.subr.mxu0 %v399
        %865 = vmatpush1.msra.mxu0 %v398
        %866 = vmatprep.subr.mxu0 %v383
        %867 = vmatpush1.msra.mxu0 %v382
        %868 = vmatprep.subr.mxu0 %v367
        %869 = vmatpush1.msra.mxu0 %v366
        %870 = vmatprep.subr.mxu0 %v351
        %871 = vmatpush1.msra.mxu0 %v350
        %872 = vmatprep.subr.mxu0 %v335
        %873 = vmatpush1.msra.mxu0 %v334
        %874 = vmatprep.subr.mxu0 %v319
        %875 = vmatpush1.msra.mxu0 %v318
        %876 = vmatprep.subr.mxu0 %v303
        %877 = vmatpush1.msra.mxu0 %v302
        %878 = vmatprep.subr.mxu0 %v287
        %879 = vmatpush1.msra.mxu0 %v286
        %880 = vmatprep.subr.mxu0 %v271
        %881 = vmatpush1.msra.mxu0 %v270
        %882 = vmatprep.subr.mxu0 %v255
        %883 = vmatpush1.msra.mxu0 %v254
        %884 = vmatprep.subr.mxu0 %v239
        %885 = vmatpush1.msra.mxu0 %v238
        %886 = vmatprep.subr.mxu0 %v223
        %887 = vmatpush1.msra.mxu0 %v222
        %888 = vmatprep.subr.mxu0 %v207
        %889 = vmatpush1.msra.mxu0 %v206
        %890 = vmatprep.subr.mxu0 %v191
        %891 = vmatpush1.msra.mxu0 %v190
        %892 = vmatprep.subr.mxu0 0.0
        %893 = vmatpush2.msra.mxu0 0.0
        %894 = vmatprep.subr.mxu0 0.0
        %895 = vmatpush2.msra.mxu0 0.0
        %896 = vmatprep.subr.mxu0 0.0
        %897 = vmatpush2.msra.mxu0 0.0
        %898 = vmatprep.subr.mxu0 0.0
        %899 = vmatpush2.msra.mxu0 0.0
        %900 = vmatprep.subr.mxu0 0.0
        %901 = vmatpush2.msra.mxu0 0.0
        %902 = vmatprep.subr.mxu0 0.0
        %903 = vmatpush2.msra.mxu0 0.0
        %904 = vmatprep.subr.mxu0 0.0
        %905 = vmatpush2.msra.mxu0 0.0
        %906 = vmatprep.subr.mxu0 0.0
        %907 = vmatpush2.msra.mxu0 0.0
        %908 = vmatprep.subr.mxu0 0.0
        %909 = vmatpush2.msra.mxu0 0.0
        %910 = vmatprep.subr.mxu0 0.0
        %911 = vmatpush2.msra.mxu0 0.0
        %912 = vmatprep.subr.mxu0 0.0
        %913 = vmatpush2.msra.mxu0 0.0
        %914 = vmatprep.subr.mxu0 0.0
        %915 = vmatpush2.msra.mxu0 0.0
        %916 = vmatprep.subr.mxu0 0.0
        %917 = vmatpush2.msra.mxu0 0.0
        %918 = vmatprep.subr.mxu0 0.0
        %919 = vmatpush2.msra.mxu0 0.0
        %920 = vmatprep.subr.mxu0 0.0
        %921 = vmatpush2.msra.mxu0 0.0
        %922 = vmatprep.subr.mxu0 0.0
        %923 = vmatpush2.msra.mxu0 0.0
        %924 = vmatprep.mubr.f32.mxu0 0.0
        %925 = vmatmul.mubr.f32.gmra.mxu0 %v177
        %v926 = vpop.f32.mrf.mxu0
        %v927 = vadd.f32 0.0, %v926
        %v928 = vpop.f32.mrf.mxu0
        %v929 = vadd.f32 0.0, %v928
        %930 = vdwg.mxu0
        %931 = vmatprep.subr.mxu0 %v433
        %932 = vmatpush1.msra.mxu0 %v432
        %933 = vmatprep.subr.mxu0 %v417
        %934 = vmatpush1.msra.mxu0 %v416
        %935 = vmatprep.subr.mxu0 %v401
        %936 = vmatpush1.msra.mxu0 %v400
        %937 = vmatprep.subr.mxu0 %v385
        %938 = vmatpush1.msra.mxu0 %v384
        %939 = vmatprep.subr.mxu0 %v369
        %940 = vmatpush1.msra.mxu0 %v368
        %941 = vmatprep.subr.mxu0 %v353
        %942 = vmatpush1.msra.mxu0 %v352
        %943 = vmatprep.subr.mxu0 %v337
        %944 = vmatpush1.msra.mxu0 %v336
        %945 = vmatprep.subr.mxu0 %v321
        %946 = vmatpush1.msra.mxu0 %v320
        %947 = vmatprep.subr.mxu0 %v305
        %948 = vmatpush1.msra.mxu0 %v304
        %949 = vmatprep.subr.mxu0 %v289
        %950 = vmatpush1.msra.mxu0 %v288
        %951 = vmatprep.subr.mxu0 %v273
        %952 = vmatpush1.msra.mxu0 %v272
        %953 = vmatprep.subr.mxu0 %v257
        %954 = vmatpush1.msra.mxu0 %v256
        %955 = vmatprep.subr.mxu0 %v241
        %956 = vmatpush1.msra.mxu0 %v240
        %957 = vmatprep.subr.mxu0 %v225
        %958 = vmatpush1.msra.mxu0 %v224
        %959 = vmatprep.subr.mxu0 %v209
        %960 = vmatpush1.msra.mxu0 %v208
        %961 = vmatprep.subr.mxu0 %v193
        %962 = vmatpush1.msra.mxu0 %v192
        %963 = vmatprep.subr.mxu0 0.0
        %964 = vmatpush2.msra.mxu0 0.0
        %965 = vmatprep.subr.mxu0 0.0
        %966 = vmatpush2.msra.mxu0 0.0
        %967 = vmatprep.subr.mxu0 0.0
        %968 = vmatpush2.msra.mxu0 0.0
        %969 = vmatprep.subr.mxu0 0.0
        %970 = vmatpush2.msra.mxu0 0.0
        %971 = vmatprep.subr.mxu0 0.0
        %972 = vmatpush2.msra.mxu0 0.0
        %973 = vmatprep.subr.mxu0 0.0
        %974 = vmatpush2.msra.mxu0 0.0
        %975 = vmatprep.subr.mxu0 0.0
        %976 = vmatpush2.msra.mxu0 0.0
        %977 = vmatprep.subr.mxu0 0.0
        %978 = vmatpush2.msra.mxu0 0.0
        %979 = vmatprep.subr.mxu0 0.0
        %980 = vmatpush2.msra.mxu0 0.0
        %981 = vmatprep.subr.mxu0 0.0
        %982 = vmatpush2.msra.mxu0 0.0
        %983 = vmatprep.subr.mxu0 0.0
        %984 = vmatpush2.msra.mxu0 0.0
        %985 = vmatprep.subr.mxu0 0.0
        %986 = vmatpush2.msra.mxu0 0.0
        %987 = vmatprep.subr.mxu0 0.0
        %988 = vmatpush2.msra.mxu0 0.0
        %989 = vmatprep.subr.mxu0 0.0
        %990 = vmatpush2.msra.mxu0 0.0
        %991 = vmatprep.subr.mxu0 0.0
        %992 = vmatpush2.msra.mxu0 0.0
        %993 = vmatprep.subr.mxu0 0.0
        %994 = vmatpush2.msra.mxu0 0.0
        %995 = vmatprep.mubr.f32.mxu0 0.0
        %996 = vmatmul.mubr.f32.gmra.mxu0 %v177
        %v997 = vpop.f32.mrf.mxu0
        %v998 = vadd.f32 0.0, %v997
        %v999 = vpop.f32.mrf.mxu0
        %v1000 = vadd.f32 0.0, %v999
        %1001 = vdwg.mxu0
        %v1018 = vcombine.low %v501, %v503
        %v1019 = vcombine.low %v572, %v574
        %v1020 = vcombine.low %v643, %v645
        %v1021 = vcombine.low %v714, %v716
        %v1022 = vcombine.low %v785, %v787
        %v1023 = vcombine.low %v856, %v858
        %v1024 = vcombine.low %v927, %v929
        %v1025 = vcombine.low %v998, %v1000
        %1034 = vst [vmem:[%s174] sm:$0xff] %v1018
        %1035 = vst [vmem:[%s174 + $0x8] sm:$0xff] %v1019
        %1036 = vst [vmem:[%s174 + $0x10] sm:$0xff] %v1020
        %1037 = vst [vmem:[%s174 + $0x18] sm:$0xff] %v1021
        %1038 = vst [vmem:[%s174 + $0x20] sm:$0xff] %v1022
        %1039 = vst [vmem:[%s174 + $0x28] sm:$0xff] %v1023
        %1040 = vst [vmem:[%s174 + $0x30] sm:$0xff] %v1024
        %1041 = vst [vmem:[%s174 + $0x38] sm:$0xff] %v1025
        %s1042 = sand.u32 %s75, 1
        %s1043 = scalar_lea.sflag [#allocation4], %s1042
        %s1044 = sand.u32 %s75, 1
        %s1045 = smul.addr %s1044, 64
        %s1046 = scalar_lea.vmem [#allocation7], %s1045
        // Predicated region
        $region37: #{tpu_custom_call.1} parent=27 // pred_check
          %p1047 = pneg %p85
        $region38: #{tpu_custom_call.1} parent=27 // pred_check_branch
          %1049 = sbr.rel (%p1047) target = $region40
        $region39: #{tpu_custom_call.1} parent=27 // pred_region
          %s1050 = smul.u32 16, %s20
          %s1052 = ssub.s32 1024, 1024
          %1053 = vsyncadd %s1043, %s1052
          %s1054 = smul.addr %s1050, 64
          %s1055 = scalar_lea.hbm %s2, %s1054
          %s1057 = sshll.u32 %s1046, 4
          %s1058 = int_to_ptr.vmem [resolvable:$true] %s1057
          %1060 = dma.vmem_to_hbm [thread:$0]  %s1058, 1024, %s1055, %s1043
        $region40: #{tpu_custom_call.1} parent=27 // pred_fallthru
          _
      $region28: #{tpu_custom_call.1} parent=5 // pred_fallthru
        _
      %p1061 = scmp.le.s32.totalorder 2, %s15
      // Predicated region
      $region41: #{tpu_custom_call.1} parent=5 // pred_check
        %p1062 = pneg %p1061
      $region42: #{tpu_custom_call.1} parent=5 // pred_check_branch
        %1064 = sbr.rel (%p1062) target = $region44
      $region43: #{tpu_custom_call.1} parent=5 // pred_region
        %s1065 = ssub.s32 %s15, 2
        // Predicated region
        $region45: #{tpu_custom_call.1} parent=43 // pred_check
          %p1066 = pneg %p91
        $region46: #{tpu_custom_call.1} parent=43 // pred_check_branch
          %1068 = sbr.rel (%p1066) target = $region48
        $region47: #{tpu_custom_call.1} parent=43 // pred_region
          %s1069 = sand.u32 %s76, 1
          %s1070 = scalar_lea.sflag [#allocation4], %s1069
          %s1071 = sand.u32 %s76, 1
          %s1072 = smul.addr %s1071, 64
          %s1073 = scalar_lea.vmem [#allocation7], %s1072
          %1074 = dma.done %s1070, 1024
        $region48: #{tpu_custom_call.1} parent=43 // pred_fallthru
          _
      $region44: #{tpu_custom_call.1} parent=5 // pred_fallthru
        _
    $region6: #{tpu_custom_call.1} parent=1 // loop_footer
      %s19 = sadd.s32 1, %s15
    $region7: #{tpu_custom_call.1} parent=1 // loop_footer_branch
      %14 = sbr.rel target = $region3
    $region8: #{tpu_custom_call.1} parent=1 // loop_exit
      _
    %1075 = vsyncpa [#allocation3], 1
    %s1076 = scalar_lea.sflag [#allocation3], 1
    %1077 = vsyncpa %s1076, 1
    %1078 = vsyncpa [#allocation6], 1
    %s1079 = scalar_lea.sflag [#allocation6], 1
    %1080 = vsyncpa %s1079, 1
    %1081 = vsyncpa [#allocation4], 1
    %s1082 = scalar_lea.sflag [#allocation4], 1
    %1083 = vsyncpa %s1082, 1

</llo_original>
